<compile_context>
chip_gen: v5e
topology: v5e:2x2
jax: 0.10.0
libtpu: 0.0.40
codegen_flags: <defaults>
</compile_context>

<pallas_src>
import jax
import jax.numpy as jnp
from jax import lax
from jax.experimental import pallas as pl
from jax.experimental.pallas import tpu as pltpu


_NEG_BIG = -1e30  # finite "minus infinity" for the additive mask


def _round_up(v, m):
    return (v + m - 1) // m * m


def _seq_attn_kernel(x_ref, y_ref, maskb_ref, w_ref, b_ref, o_ref, yproj_ref):
    """One (batch, Lx-tile) grid step.

    x_ref     : (1, TLx, Dp)  bf16   document tile
    y_ref     : (1, Lyp, Dp)  bf16   full question (resident across Lx tiles)
    maskb_ref : (1, 1,  Lyp)  f32    additive mask (0 valid / -1e30 masked+pad)
    w_ref     : (Dp, Dp)      bf16   shared Linear weight, pre-transposed
    b_ref     : (1,  Dp)      f32    Linear bias
    o_ref     : (1, TLx, Dp)  f32    output tile
    yproj_ref : (Lyp, Dp)     bf16   VMEM cache of relu(y @ W^T + b)
    """
    tx = pl.program_id(1)
    w = w_ref[...]
    b = b_ref[...]

    # Question projection: computed once per batch element, reused across the
    # Lx-tile axis (axis 1 is "arbitrary", so the scratch carries state).
    @pl.when(tx == 0)
    def _():
        y_proj = jnp.maximum(
            jnp.dot(y_ref[0], w, preferred_element_type=jnp.float32) + b, 0.0)
        yproj_ref[...] = y_proj.astype(jnp.bfloat16)

    # Document-tile projection (same shared weights as in the PyTorch module).
    x_proj = jnp.maximum(
        jnp.dot(x_ref[0], w, preferred_element_type=jnp.float32) + b, 0.0
    ).astype(jnp.bfloat16)

    # Attention scores (TLx, Lyp): contract on D directly, no transpose.
    scores = lax.dot_general(
        x_proj, yproj_ref[...],
        dimension_numbers=(((1,), (1,)), ((), ())),
        preferred_element_type=jnp.float32)
    scores = scores + maskb_ref[0]          # additive mask: one vadd/element

    # Softmax over the question-length axis (f32 math).
    m = jnp.max(scores, axis=-1, keepdims=True)
    e = jnp.exp(scores - m)
    inv = pl.reciprocal(jnp.sum(e, axis=-1, keepdims=True), approx=True)
    alpha = (e * inv).astype(jnp.bfloat16)

    # Attention-weighted sum of the (unprojected) question embeddings.
    o_ref[0] = jnp.dot(alpha, y_ref[0],
                       preferred_element_type=jnp.float32).astype(o_ref.dtype)


def seq_attn_match(x, y, y_mask, w, bias):
    """x:(B,Lx,D)  y:(B,Ly,D)  y_mask:(B,Ly) bool (True => masked)
       w:(D,D) nn.Linear weight  bias:(D,)  ->  (B,Lx,D) float32."""
    B, Lx, D = x.shape
    _, Ly, _ = y.shape

    # Padded / tiled sizes: hidden & question length -> multiples of 128 for
    # lane-dense MXU operands and full-lane stores; document tile -> multiple
    # of 16 sublanes (bf16 packing), up to 256 rows, tiled along the second
    # grid axis.
    dp = _round_up(D, 128)
    lyp = _round_up(Ly, 128)
    tlx = min(256, _round_up(Lx, 16))
    lxp = _round_up(Lx, tlx)
    num_tx = lxp // tlx

    x_p = jnp.pad(x, ((0, 0), (0, lxp - Lx), (0, dp - D))).astype(jnp.bfloat16)
    y_p = jnp.pad(y, ((0, 0), (0, lyp - Ly), (0, dp - D))).astype(jnp.bfloat16)
    # nn.Linear computes v @ W^T + b; pre-transpose and zero-pad the weight.
    w_p = jnp.pad(w.T.astype(jnp.float32),
                  ((0, dp - D), (0, dp - D))).astype(jnp.bfloat16)
    b_p = jnp.pad(bias.astype(jnp.float32), (0, dp - D)).reshape(1, dp)
    # Additive mask: 0 for valid, -1e30 for masked AND padded question slots
    # (padded y rows project to relu(bias) != 0, so they must be masked out).
    maskb = jnp.where(y_mask, _NEG_BIG, 0.0).astype(jnp.float32)
    maskb = jnp.pad(maskb, ((0, 0), (0, lyp - Ly)), constant_values=_NEG_BIG)
    maskb = maskb.reshape(B, 1, lyp)

    # Explicit VMEM budget: double-buffered pipeline blocks + resident
    # y/W/bias + y_proj scratch + temporaries, with generous headroom.
    vmem_bytes = (
        2 * tlx * dp * 2              # x tiles (bf16, double-buffered)
        + 2 * tlx * dp * 4            # out tiles (f32, double-buffered)
        + 2 * lyp * dp * 2            # y (bf16)
        + 2 * lyp * 4                 # mask bias
        + 2 * dp * dp * 2             # W
        + 2 * dp * 4                  # bias
        + lyp * dp * 2                # y_proj scratch
        + 6 * tlx * max(lyp, dp) * 4  # scores/exp/proj temporaries headroom
    )
    vmem_limit = int(min(max(4 * vmem_bytes, 16 << 20), 64 << 20))

    flops = B * (2 * dp * dp * (lxp + lyp) + 4 * lxp * lyp * dp)
    bytes_accessed = (x_p.size * 2 + B * num_tx * (lyp * dp * 2 + dp * dp * 2)
                      + maskb.size * 4 + B * lxp * dp * 4)

    out = pl.pallas_call(
        _seq_attn_kernel,
        out_shape=jax.ShapeDtypeStruct((B, lxp, dp), jnp.float32),
        grid_spec=pltpu.PrefetchScalarGridSpec(
            num_scalar_prefetch=0,
            grid=(B, num_tx),
            in_specs=[
                pl.BlockSpec((1, tlx, dp), lambda b, t: (b, t, 0)),   # x tile
                pl.BlockSpec((1, lyp, dp), lambda b, t: (b, 0, 0)),   # y
                pl.BlockSpec((1, 1, lyp), lambda b, t: (b, 0, 0)),    # mask bias
                pl.BlockSpec((dp, dp), lambda b, t: (0, 0)),          # W^T shared
                pl.BlockSpec((1, dp), lambda b, t: (0, 0)),           # bias shared
            ],
            out_specs=pl.BlockSpec((1, tlx, dp), lambda b, t: (b, t, 0)),
            scratch_shapes=[pltpu.VMEM((lyp, dp), jnp.bfloat16)],
        ),
        compiler_params=pltpu.CompilerParams(
            dimension_semantics=("parallel", "arbitrary"),
            vmem_limit_bytes=vmem_limit),
        cost_estimate=pl.CostEstimate(
            flops=int(flops),
            transcendentals=int(B * lxp * lyp),
            bytes_accessed=int(bytes_accessed)),
    )(x_p, y_p, maskb, w_p, b_p)

    # Strip the Lx / D padding.
    return out[:, :Lx, :D]


def seq_attn_match_ref(x, y, y_mask, w, bias):
    """Pure-JAX reference mirroring the PyTorch forward, with the same bf16
    operand rounding the kernel uses (f32 accumulation), for a tight compare."""
    xb = x.astype(jnp.bfloat16)
    yb = y.astype(jnp.bfloat16)
    wt = w.T.astype(jnp.bfloat16)
    x_proj = jax.nn.relu(
        jnp.einsum("bld,do->blo", xb, wt,
                   preferred_element_type=jnp.float32) + bias)
    y_proj = jax.nn.relu(
        jnp.einsum("bld,do->blo", yb, wt,
                   preferred_element_type=jnp.float32) + bias)
    scores = jnp.einsum("bxd,byd->bxy",
                        x_proj.astype(jnp.bfloat16),
                        y_proj.astype(jnp.bfloat16),
                        preferred_element_type=jnp.float32)
    scores = jnp.where(y_mask[:, None, :], -jnp.inf, scores)
    alpha = jax.nn.softmax(scores, axis=-1)
    return jnp.einsum("bxy,byd->bxd", alpha.astype(jnp.bfloat16), yb,
                      preferred_element_type=jnp.float32)


if __name__ == "__main__":
    B, Lx, Ly, D = 2, 16, 8, 32
    key = jax.random.PRNGKey(0)
    kx, ky, kw, kb, km = jax.random.split(key, 5)

    x = jax.random.normal(kx, (B, Lx, D), dtype=jnp.float32)
    y = jax.random.normal(ky, (B, Ly, D), dtype=jnp.float32)
    # Deterministic Linear(D, D) parameters (synthetic, not a checkpoint load).
    w = jax.random.normal(kw, (D, D), dtype=jnp.float32) * (1.0 / jnp.sqrt(D))
    bias = jax.random.normal(kb, (D,), dtype=jnp.float32) * 0.1
    # Boolean mask: True => masked question position (keep at least one valid).
    y_mask = jax.random.uniform(km, (B, Ly)) > 0.7
    y_mask = y_mask.at[:, 0].set(False)

    out = seq_attn_match(x, y, y_mask, w, bias)
    out = jax.block_until_ready(out)

    ref = seq_attn_match_ref(x, y, y_mask, w, bias)
    assert out.shape == (B, Lx, D)
    assert bool(jnp.allclose(out, ref, atol=1e-2, rtol=1e-2)), \
        "mismatch vs reference"

    print("KERNEL_OK")
</pallas_src>

<mosaic_0001>
module attributes {stable_mosaic.version = 11 : i64} {
  func.func @_seq_attn_kernel(%arg0: i32, %arg1: i32, %arg2: memref<1x16x128xbf16, #tpu.memory_space<vmem>>, %arg3: memref<1x128x128xbf16, #tpu.memory_space<vmem>>, %arg4: memref<1x1x128xf32, #tpu.memory_space<vmem>>, %arg5: memref<128x128xbf16, #tpu.memory_space<vmem>>, %arg6: memref<1x128xf32, #tpu.memory_space<vmem>>, %arg7: memref<1x16x128xf32, #tpu.memory_space<vmem>>, %arg8: memref<128x128xbf16, #tpu.memory_space<vmem>>) attributes {dimension_semantics = [#tpu.dimension_semantics<parallel>, #tpu.dimension_semantics<arbitrary>], iteration_bounds = array<i64: 2, 1>, scalar_prefetch = 0 : i64, scratch_operands = 1 : i64, tpu.core_type = #tpu.core_type<tc>, window_params = [{transform_indices = @transform_0, window_bounds = array<i64: 1, 16, 128>}, {transform_indices = @transform_1, window_bounds = array<i64: 1, 128, 128>}, {transform_indices = @transform_2, window_bounds = array<i64: 1, 1, 128>}, {pipeline_mode = #tpu.pipeline_mode<synchronous>, transform_indices = @transform_3, window_bounds = array<i64: 128, 128>}, {pipeline_mode = #tpu.pipeline_mode<synchronous>, transform_indices = @transform_4, window_bounds = array<i64: 1, 128>}, {transform_indices = @transform_5, window_bounds = array<i64: 1, 16, 128>}]} {
    %c0 = arith.constant 0 : index
    %c0_0 = arith.constant 0 : index
    %0 = vector.load %arg5[%c0, %c0_0] : memref<128x128xbf16, #tpu.memory_space<vmem>>, vector<128x128xbf16>
    %c0_1 = arith.constant 0 : index
    %c0_2 = arith.constant 0 : index
    %1 = vector.load %arg6[%c0_1, %c0_2] : memref<1x128xf32, #tpu.memory_space<vmem>>, vector<1x128xf32>
    %c0_i32 = arith.constant 0 : i32
    %2 = arith.cmpi eq, %arg1, %c0_i32 : i32
    %3 = arith.extui %2 : i1 to i32
    %c0_i32_3 = arith.constant 0 : i32
    %4 = arith.cmpi ne, %3, %c0_i32_3 : i32
    scf.if %4 {
      %c0_23 = arith.constant 0 : index
      %c0_24 = arith.constant 0 : index
      %c0_25 = arith.constant 0 : index
      %36 = vector.load %arg3[%c0_23, %c0_24, %c0_25] : memref<1x128x128xbf16, #tpu.memory_space<vmem>>, vector<1x128x128xbf16>
      %37 = vector.shape_cast %36 : vector<1x128x128xbf16> to vector<128x128xbf16>
      %cst_26 = arith.constant dense<0.000000e+00> : vector<128x128xf32>
      %38 = tpu.matmul %37, %0, %cst_26 {dimension_numbers = #tpu.dot_dimension_numbers<[1], [0], [0], [1], [0, 0, 1, 1], [], []>} : vector<128x128xbf16>, vector<128x128xbf16>, vector<128x128xf32> -> vector<128x128xf32>
      %39 = vector.broadcast %1 : vector<1x128xf32> to vector<128x128xf32>
      %40 = arith.addf %38, %39 : vector<128x128xf32>
      %cst_27 = arith.constant 0.000000e+00 : f32
      %41 = vector.broadcast %cst_27 : f32 to vector<128x128xf32>
      %42 = arith.maximumf %40, %41 : vector<128x128xf32>
      %43 = arith.truncf %42 : vector<128x128xf32> to vector<128x128xbf16>
      %c0_28 = arith.constant 0 : index
      %c0_29 = arith.constant 0 : index
      %44 = vector.load %arg8[%c0_28, %c0_29] : memref<128x128xbf16, #tpu.memory_space<vmem>>, vector<128x128xbf16>
      tpu.vector_store %arg8[%c0_28, %c0_29], %43 {strides = array<i32>} : memref<128x128xbf16, #tpu.memory_space<vmem>>, vector<128x128xbf16>,
    } else {
    }
    %c0_4 = arith.constant 0 : index
    %c0_5 = arith.constant 0 : index
    %c0_6 = arith.constant 0 : index
    %5 = vector.load %arg2[%c0_4, %c0_5, %c0_6] : memref<1x16x128xbf16, #tpu.memory_space<vmem>>, vector<1x16x128xbf16>
    %6 = vector.shape_cast %5 : vector<1x16x128xbf16> to vector<16x128xbf16>
    %cst = arith.constant dense<0.000000e+00> : vector<16x128xf32>
    %7 = tpu.matmul %6, %0, %cst {dimension_numbers = #tpu.dot_dimension_numbers<[1], [0], [0], [1], [0, 0, 1, 1], [], []>} : vector<16x128xbf16>, vector<128x128xbf16>, vector<16x128xf32> -> vector<16x128xf32>
    %8 = vector.broadcast %1 : vector<1x128xf32> to vector<16x128xf32>
    %9 = arith.addf %7, %8 : vector<16x128xf32>
    %cst_7 = arith.constant 0.000000e+00 : f32
    %10 = vector.broadcast %cst_7 : f32 to vector<16x128xf32>
    %11 = arith.maximumf %9, %10 : vector<16x128xf32>
    %12 = arith.truncf %11 : vector<16x128xf32> to vector<16x128xbf16>
    %c0_8 = arith.constant 0 : index
    %c0_9 = arith.constant 0 : index
    %13 = vector.load %arg8[%c0_8, %c0_9] : memref<128x128xbf16, #tpu.memory_space<vmem>>, vector<128x128xbf16>
    %cst_10 = arith.constant dense<0.000000e+00> : vector<16x128xf32>
    %14 = tpu.matmul %12, %13, %cst_10 {dimension_numbers = #tpu.dot_dimension_numbers<[1], [1], [0], [0], [0, 0, 1, 0], [], []>} : vector<16x128xbf16>, vector<128x128xbf16>, vector<16x128xf32> -> vector<16x128xf32>
    %c0_11 = arith.constant 0 : index
    %c0_12 = arith.constant 0 : index
    %c0_13 = arith.constant 0 : index
    %15 = vector.load %arg4[%c0_11, %c0_12, %c0_13] : memref<1x1x128xf32, #tpu.memory_space<vmem>>, vector<1x1x128xf32>
    %16 = vector.shape_cast %15 : vector<1x1x128xf32> to vector<1x128xf32>
    %17 = vector.broadcast %16 : vector<1x128xf32> to vector<16x128xf32>
    %18 = arith.addf %14, %17 : vector<16x128xf32>
    %cst_14 = arith.constant dense<0xFF800000> : vector<16xf32>
    %19 = vector.multi_reduction <maximumf>, %18, %cst_14 [1] : vector<16x128xf32> to vector<16xf32>
    %20 = vector.shape_cast %19 : vector<16xf32> to vector<16x1xf32>
    %21 = vector.broadcast %20 : vector<16x1xf32> to vector<16x128xf32>
    %22 = arith.subf %18, %21 : vector<16x128xf32>
    %23 = math.exp %22 : vector<16x128xf32>
    %cst_15 = arith.constant dense<0.000000e+00> : vector<16xf32>
    %24 = vector.multi_reduction <add>, %23, %cst_15 [1] : vector<16x128xf32> to vector<16xf32>
    %25 = vector.shape_cast %24 : vector<16xf32> to vector<16x1xf32>
    %26 = tpu.reciprocal %25 {approx = true} : vector<16x1xf32> -> vector<16x1xf32>
    %27 = vector.broadcast %26 : vector<16x1xf32> to vector<16x128xf32>
    %28 = arith.mulf %23, %27 : vector<16x128xf32>
    %29 = arith.truncf %28 : vector<16x128xf32> to vector<16x128xbf16>
    %c0_16 = arith.constant 0 : index
    %c0_17 = arith.constant 0 : index
    %c0_18 = arith.constant 0 : index
    %30 = vector.load %arg3[%c0_16, %c0_17, %c0_18] : memref<1x128x128xbf16, #tpu.memory_space<vmem>>, vector<1x128x128xbf16>
    %31 = vector.shape_cast %30 : vector<1x128x128xbf16> to vector<128x128xbf16>
    %cst_19 = arith.constant dense<0.000000e+00> : vector<16x128xf32>
    %32 = tpu.matmul %29, %31, %cst_19 {dimension_numbers = #tpu.dot_dimension_numbers<[1], [0], [0], [1], [0, 0, 1, 1], [], []>} : vector<16x128xbf16>, vector<128x128xbf16>, vector<16x128xf32> -> vector<16x128xf32>
    %c0_20 = arith.constant 0 : index
    %c0_21 = arith.constant 0 : index
    %c0_22 = arith.constant 0 : index
    %33 = vector.load %arg7[%c0_20, %c0_21, %c0_22] : memref<1x16x128xf32, #tpu.memory_space<vmem>>, vector<1x16x128xf32>
    %34 = vector.shape_cast %33 : vector<1x16x128xf32> to vector<16x128xf32>
    %35 = vector.shape_cast %32 : vector<16x128xf32> to vector<1x16x128xf32>
    tpu.vector_store %arg7[%c0_20, %c0_21, %c0_22], %35 {strides = array<i32>} : memref<1x16x128xf32, #tpu.memory_space<vmem>>, vector<1x16x128xf32>,
    return
  }
  func.func @transform_0(%arg0: i32, %arg1: i32) -> (i32, i32, i32) {
    %c0_i32 = arith.constant 0 : i32
    %c0_i32_0 = arith.constant 0 : i32
    return %arg0, %arg1, %c0_i32 : i32, i32, i32
  }
  func.func @transform_1(%arg0: i32, %arg1: i32) -> (i32, i32, i32) {
    %c0_i32 = arith.constant 0 : i32
    %c0_i32_0 = arith.constant 0 : i32
    %c0_i32_1 = arith.constant 0 : i32
    return %arg0, %c0_i32, %c0_i32_0 : i32, i32, i32
  }
  func.func @transform_2(%arg0: i32, %arg1: i32) -> (i32, i32, i32) {
    %c0_i32 = arith.constant 0 : i32
    %c0_i32_0 = arith.constant 0 : i32
    %c0_i32_1 = arith.constant 0 : i32
    return %arg0, %c0_i32, %c0_i32_0 : i32, i32, i32
  }
  func.func @transform_3(%arg0: i32, %arg1: i32) -> (i32, i32) {
    %c0_i32 = arith.constant 0 : i32
    %c0_i32_0 = arith.constant 0 : i32
    %c0_i32_1 = arith.constant 0 : i32
    return %c0_i32, %c0_i32_0 : i32, i32
  }
  func.func @transform_4(%arg0: i32, %arg1: i32) -> (i32, i32) {
    %c0_i32 = arith.constant 0 : i32
    %c0_i32_0 = arith.constant 0 : i32
    %c0_i32_1 = arith.constant 0 : i32
    return %c0_i32, %c0_i32_0 : i32, i32
  }
  func.func @transform_5(%arg0: i32, %arg1: i32) -> (i32, i32, i32) {
    %c0_i32 = arith.constant 0 : i32
    %c0_i32_0 = arith.constant 0 : i32
    return %arg0, %arg1, %c0_i32 : i32, i32, i32
  }
}

</mosaic_0001>

<llo_original>
// kernel: tpu_custom_call.1
$region0: #{tpu_custom_call.1}
  #allocation0 [shape = 'u32[]', space=smem, size = 0x4, offset = 0x4, fixed_abs, tag = 'smem constant byte address 0x4 - core index']
  #allocation1 [shape = 'u32[72,128]{1,0:T(1,128)}', space=vmem, size = 0x9000, scoped, tag = 'internal scratch']
  #allocation2 [shape = 'bf16[128,128]{1,0:T(8,128)(2,1)}', space=vmem, size = 0x8000, scoped, tag = 'scratch operand']
  %s0 = inlined_call_operand.hbm [shape: bf16[2,16,128], index: 0, kind: input, shape index: {}]
  %s1 = inlined_call_operand.hbm [shape: bf16[2,128,128], index: 1, kind: input, shape index: {}]
  %s2 = inlined_call_operand.hbm [shape: f32[2,1,128], index: 2, kind: input, shape index: {}]
  %s3 = inlined_call_operand.hbm [shape: bf16[128,128], index: 3, kind: input, shape index: {}]
  %s4 = inlined_call_operand.vmem [shape: f32[1,128], index: 4, kind: input, shape index: {}]
  %s5 = inlined_call_operand.hbm [shape: f32[2,16,128], index: 5, kind: output, shape index: {}]
  %s6 = sld [smem:[#allocation0]]
  $region73: #{tpu_custom_call.1} parent=0
    _
  %s8 = ssub.s32 1, %s6
  %s9 = scalar_select 0, %s8, %s6
  $region1: #{tpu_custom_call.1} parent=0
    #allocation3 [shape = 'u8[8192]{0}', space=vmem, size = 0x2000, scoped, tag = 'input window, operand 0']
    #allocation4 [shape = 's32[2]{0}', space=sflag, size = 0x8, scoped, tag = 'scoped memory for tpu_custom_call.1']
    #allocation5 [shape = 's32[2]{0}', space=sflag, size = 0x8, scoped, tag = 'scoped memory for tpu_custom_call.1']
    #allocation6 [shape = 'u8[65536]{0}', space=vmem, size = 0x10000, scoped, tag = 'input window, operand 1']
    #allocation7 [shape = 's32[2]{0}', space=sflag, size = 0x8, scoped, tag = 'scoped memory for tpu_custom_call.1']
    #allocation8 [shape = 'u8[1024]{0}', space=vmem, size = 0x400, scoped, tag = 'input window, operand 2']
    #allocation9 [shape = 'u8[32768]{0}', space=vmem, size = 0x8000, scoped, tag = 'input window, operand 3, single buffered']
    #allocation10 [shape = 's32[1]{0}', space=sflag, size = 0x4, scoped, tag = 'scoped memory for tpu_custom_call.1']
    #allocation11 [shape = 'u8[16384]{0}', space=vmem, size = 0x4000, scoped, tag = 'output window, operand 0']
    %10 = vsyncpa [#allocation4], 0
    %s11 = scalar_lea.sflag [#allocation4], 1
    %12 = vsyncpa %s11, 0
    %13 = vsyncpa [#allocation7], 0
    %s14 = scalar_lea.sflag [#allocation7], 1
    %15 = vsyncpa %s14, 0
    %16 = vsyncpa [#allocation10], 0
    %17 = vsyncpa [#allocation5], 0
    %s18 = scalar_lea.sflag [#allocation5], 1
    %19 = vsyncpa %s18, 0
    loop: start=0, step=1, limit=4
    $region2: #{tpu_custom_call.1} parent=1 // loop_pre_header
      _
    $region3: #{tpu_custom_call.1} parent=1 // loop_header
      %s21 = sphi 0, %s25
      %p22 = scmp.ge.s32.totalorder %s21, 4
      %s28 = sphi 0, %s40
      %s29 = sphi 0, %s36
      %s30 = sphi 0, %s28
      %s31 = sphi 0, %s29
      %s32 = sphi 0, %s30
      %s33 = sphi 0, %s31
      %s45 = sphi 0, %s47
      %s48 = sphi 0, %s45
      %s49 = sphi 0, %s48
      %s65 = sphi 0, %s49
      %s71 = sphi 0, %s73
      %s74 = sphi 0, %s71
      %s75 = sphi 0, %s74
      %s91 = sphi 0, %s75
      %s97 = sphi 0, %s99
      %s100 = sphi 0, %s97
      %s101 = sphi 0, %s100
      %s117 = sphi 0, %s101
      %s121 = sphi 0, %s121
      %s123 = sphi 0, %s121
      %s124 = sphi 0, %s123
      %s138 = sphi 0, %s124
      %s142 = sphi 0, %s142
      %s144 = sphi 0, %s142
      %s145 = sphi 0, %s144
      %s159 = sphi 0, %s145
      %s167 = sphi 0, %s169
      %s170 = sphi 0, %s167
      %s171 = sphi 0, %s170
      %s187 = sphi 0, %s171
    $region4: #{tpu_custom_call.1} parent=1 // loop_header_branch
      %24 = sbr.rel (%p22) target = $region8
    $region5: #{tpu_custom_call.1} parent=1 // loop_body
      %s26 = ssub.s32 %s21, 1
      %s27 = ssub.s32 %s21, 2
      %s34 = sadd.s32 1, %s29
      %p35 = scmp.ge.s32.totalorder %s34, 1
      %s36 = scalar_select %p35, 0, %s34
      %s37 = sadd.s32 1, %s28
      %s38 = scalar_select %p35, %s37, %s28
      %p39 = scmp.ge.s32.totalorder %s38, 2
      %s40 = scalar_select %p39, 0, %s38
      %s41 = ssub.s32 %s28, %s40
      %s42 = ssub.s32 %s29, %s36
      %s43 = sor.u32 %s41, %s42
      %p44 = scmp.eq.s32.totalorder %s43, 0
      %s46 = sadd.s32 %s45, 1
      %s47 = scalar_select %p44, %s45, %s46
      %p50 = pneg %p44
      %p51 = scmp.eq.s32.totalorder %s21, 1
      %p52 = por %p50, %p51
      %p53 = scmp.ne.s32.totalorder %s45, %s48
      %p54 = scmp.eq.s32.totalorder %s21, 0
      %p55 = por %p53, %p54
      %p56 = scmp.ne.s32.totalorder %s45, %s48
      %p57 = scmp.eq.s32.totalorder %s26, 1
      %p58 = por %p56, %p57
      %p59 = scmp.ne.s32.totalorder %s48, %s49
      %p60 = scmp.eq.s32.totalorder %s26, 0
      %p61 = por %p59, %p60
      %p62 = scmp.ne.s32.totalorder %s48, %s49
      %p63 = scmp.eq.s32.totalorder %s27, 1
      %p64 = por %p62, %p63
      %p66 = scmp.ne.s32.totalorder %s49, %s65
      %p67 = scmp.eq.s32.totalorder %s27, 0
      %p68 = por %p66, %p67
      %s69 = ssub.s32 %s28, %s40
      %p70 = scmp.eq.s32.totalorder %s69, 0
      %s72 = sadd.s32 %s71, 1
      %s73 = scalar_select %p70, %s71, %s72
      %p76 = pneg %p70
      %p77 = scmp.eq.s32.totalorder %s21, 1
      %p78 = por %p76, %p77
      %p79 = scmp.ne.s32.totalorder %s71, %s74
      %p80 = scmp.eq.s32.totalorder %s21, 0
      %p81 = por %p79, %p80
      %p82 = scmp.ne.s32.totalorder %s71, %s74
      %p83 = scmp.eq.s32.totalorder %s26, 1
      %p84 = por %p82, %p83
      %p85 = scmp.ne.s32.totalorder %s74, %s75
      %p86 = scmp.eq.s32.totalorder %s26, 0
      %p87 = por %p85, %p86
      %p88 = scmp.ne.s32.totalorder %s74, %s75
      %p89 = scmp.eq.s32.totalorder %s27, 1
      %p90 = por %p88, %p89
      %p92 = scmp.ne.s32.totalorder %s75, %s91
      %p93 = scmp.eq.s32.totalorder %s27, 0
      %p94 = por %p92, %p93
      %s95 = ssub.s32 %s28, %s40
      %p96 = scmp.eq.s32.totalorder %s95, 0
      %s98 = sadd.s32 %s97, 1
      %s99 = scalar_select %p96, %s97, %s98
      %p102 = pneg %p96
      %p103 = scmp.eq.s32.totalorder %s21, 1
      %p104 = por %p102, %p103
      %p105 = scmp.ne.s32.totalorder %s97, %s100
      %p106 = scmp.eq.s32.totalorder %s21, 0
      %p107 = por %p105, %p106
      %p108 = scmp.ne.s32.totalorder %s97, %s100
      %p109 = scmp.eq.s32.totalorder %s26, 1
      %p110 = por %p108, %p109
      %p111 = scmp.ne.s32.totalorder %s100, %s101
      %p112 = scmp.eq.s32.totalorder %s26, 0
      %p113 = por %p111, %p112
      %p114 = scmp.ne.s32.totalorder %s100, %s101
      %p115 = scmp.eq.s32.totalorder %s27, 1
      %p116 = por %p114, %p115
      %p118 = scmp.ne.s32.totalorder %s101, %s117
      %p119 = scmp.eq.s32.totalorder %s27, 0
      %p120 = por %p118, %p119
      %s122 = sadd.s32 %s121, 1
      %p125 = scmp.eq.s32.totalorder %s21, 1
      %p126 = scmp.ne.s32.totalorder %s121, %s123
      %p127 = scmp.eq.s32.totalorder %s21, 0
      %p128 = por %p126, %p127
      %p129 = scmp.ne.s32.totalorder %s121, %s123
      %p130 = scmp.eq.s32.totalorder %s26, 1
      %p131 = por %p129, %p130
      %p132 = scmp.ne.s32.totalorder %s123, %s124
      %p133 = scmp.eq.s32.totalorder %s26, 0
      %p134 = por %p132, %p133
      %p135 = scmp.ne.s32.totalorder %s123, %s124
      %p136 = scmp.eq.s32.totalorder %s27, 1
      %p137 = por %p135, %p136
      %p139 = scmp.ne.s32.totalorder %s124, %s138
      %p140 = scmp.eq.s32.totalorder %s27, 0
      %p141 = por %p139, %p140
      %s143 = sadd.s32 %s142, 1
      %p146 = scmp.eq.s32.totalorder %s21, 1
      %p147 = scmp.ne.s32.totalorder %s142, %s144
      %p148 = scmp.eq.s32.totalorder %s21, 0
      %p149 = por %p147, %p148
      %p150 = scmp.ne.s32.totalorder %s142, %s144
      %p151 = scmp.eq.s32.totalorder %s26, 1
      %p152 = por %p150, %p151
      %p153 = scmp.ne.s32.totalorder %s144, %s145
      %p154 = scmp.eq.s32.totalorder %s26, 0
      %p155 = por %p153, %p154
      %p156 = scmp.ne.s32.totalorder %s144, %s145
      %p157 = scmp.eq.s32.totalorder %s27, 1
      %p158 = por %p156, %p157
      %p160 = scmp.ne.s32.totalorder %s145, %s159
      %p161 = scmp.eq.s32.totalorder %s27, 0
      %p162 = por %p160, %p161
      %s163 = ssub.s32 %s28, %s40
      %s164 = ssub.s32 %s29, %s36
      %s165 = sor.u32 %s163, %s164
      %p166 = scmp.eq.s32.totalorder %s165, 0
      %s168 = sadd.s32 %s167, 1
      %s169 = scalar_select %p166, %s167, %s168
      %p172 = pneg %p166
      %p173 = scmp.eq.s32.totalorder %s21, 1
      %p174 = por %p172, %p173
      %p175 = scmp.ne.s32.totalorder %s167, %s170
      %p176 = scmp.eq.s32.totalorder %s21, 0
      %p177 = por %p175, %p176
      %p178 = scmp.ne.s32.totalorder %s167, %s170
      %p179 = scmp.eq.s32.totalorder %s26, 1
      %p180 = por %p178, %p179
      %p181 = scmp.ne.s32.totalorder %s170, %s171
      %p182 = scmp.eq.s32.totalorder %s26, 0
      %p183 = por %p181, %p182
      %p184 = scmp.ne.s32.totalorder %s170, %s171
      %p185 = scmp.eq.s32.totalorder %s27, 1
      %p186 = por %p184, %p185
      %p188 = scmp.ne.s32.totalorder %s171, %s187
      %p189 = scmp.eq.s32.totalorder %s27, 0
      %p190 = por %p188, %p189
      %p191 = scmp.le.s32.totalorder 1, %s21
      %p192 = scmp.lt.s32.totalorder %s21, 3
      %p193 = pnand %p191, %p192
      %p194 = pneg %p193
      // Predicated region
      $region9: #{tpu_custom_call.1} parent=5 // pred_check
        _
      $region10: #{tpu_custom_call.1} parent=5 // pred_check_branch
        %196 = sbr.rel (%p193) target = $region12
      $region11: #{tpu_custom_call.1} parent=5 // pred_region
        %s197 = ssub.s32 %s21, 1
        // Predicated region
        $region13: #{tpu_custom_call.1} parent=11 // pred_check
          %p198 = pneg %p134
        $region14: #{tpu_custom_call.1} parent=11 // pred_check_branch
          %200 = sbr.rel (%p198) target = $region16
        $region15: #{tpu_custom_call.1} parent=11 // pred_region
          %202 = vsyncadd [#allocation10], 0
          %s203 = sshll.u32 %s3, 4
          %s204 = int_to_ptr.hbm [resolvable:$true] %s203
          %s205 = sshll.u32 [#allocation9], 4
          %s206 = int_to_ptr.vmem [resolvable:$true] %s205
          %211 = dma.hbm_to_vmem [thread:$0]  %s204, 1024, %s206, [#allocation10], 64, 64, 4
        $region16: #{tpu_custom_call.1} parent=11 // pred_fallthru
          _
        // Predicated region
        $region17: #{tpu_custom_call.1} parent=11 // pred_check
          %p212 = pneg %p155
        $region18: #{tpu_custom_call.1} parent=11 // pred_check_branch
          %214 = sbr.rel (%p212) target = $region20
        $region19: #{tpu_custom_call.1} parent=11 // pred_region
          _
        $region20: #{tpu_custom_call.1} parent=11 // pred_fallthru
          _
      $region12: #{tpu_custom_call.1} parent=5 // pred_fallthru
        _
      %p215 = scmp.lt.s32.totalorder %s21, 2
      // Predicated region
      $region21: #{tpu_custom_call.1} parent=5 // pred_check
        %p216 = pneg %p215
      $region22: #{tpu_custom_call.1} parent=5 // pred_check_branch
        %218 = sbr.rel (%p216) target = $region24
      $region23: #{tpu_custom_call.1} parent=5 // pred_region
        // Predicated region
        $region25: #{tpu_custom_call.1} parent=23 // pred_check
          %p219 = pneg %p55
        $region26: #{tpu_custom_call.1} parent=23 // pred_check_branch
          %221 = sbr.rel (%p219) target = $region28
        $region27: #{tpu_custom_call.1} parent=23 // pred_region
          %s222 = sand.u32 %s45, 1
          %s223 = scalar_lea.sflag [#allocation4], %s222
          %s224 = sand.u32 %s45, 1
          %s225 = smul.addr %s224, 8
          %s226 = scalar_lea.vmem [#allocation3], %s225
          %s227 = smul.u32 2, %s29
          %229 = vsyncadd %s223, 0
          %s230 = smul.addr %s28, 2
          %s231 = sadd.s32 %s227, %s230
          %s232 = smul.addr %s231, 4
          %s233 = scalar_lea.hbm %s0, %s232
          %s234 = sshll.u32 %s233, 4
          %s235 = int_to_ptr.hbm [resolvable:$true] %s234
          %s236 = sshll.u32 %s226, 4
          %s237 = int_to_ptr.vmem [resolvable:$true] %s236
          %242 = dma.hbm_to_vmem [thread:$0]  %s235, 128, %s237, %s223, 64, 64, 4
        $region28: #{tpu_custom_call.1} parent=23 // pred_fallthru
          _
        // Predicated region
        $region29: #{tpu_custom_call.1} parent=23 // pred_check
          %p243 = pneg %p81
        $region30: #{tpu_custom_call.1} parent=23 // pred_check_branch
          %245 = sbr.rel (%p243) target = $region32
        $region31: #{tpu_custom_call.1} parent=23 // pred_region
          %s246 = sand.u32 %s21, 1
          %s247 = scalar_lea.sflag [#allocation7], %s246
          %s248 = sand.u32 %s71, 1
          %s249 = smul.addr %s248, 64
          %s250 = scalar_lea.vmem [#allocation6], %s249
          %252 = vsyncadd %s247, 0
          %s253 = smul.addr %s28, 16
          %s254 = smul.addr %s253, 4
          %s255 = scalar_lea.hbm %s1, %s254
          %s256 = sshll.u32 %s255, 4
          %s257 = int_to_ptr.hbm [resolvable:$true] %s256
          %s258 = sshll.u32 %s250, 4
          %s259 = int_to_ptr.vmem [resolvable:$true] %s258
          %264 = dma.hbm_to_vmem [thread:$0]  %s257, 1024, %s259, %s247, 64, 64, 4
        $region32: #{tpu_custom_call.1} parent=23 // pred_fallthru
          _
        // Predicated region
        $region33: #{tpu_custom_call.1} parent=23 // pred_check
          %p265 = pneg %p107
        $region34: #{tpu_custom_call.1} parent=23 // pred_check_branch
          %267 = sbr.rel (%p265) target = $region36
        $region35: #{tpu_custom_call.1} parent=23 // pred_region
          %s268 = sand.u32 %s21, 1
          %s269 = scalar_lea.sflag [#allocation7], %s268
          %s270 = sand.u32 %s97, 1
          %s271 = scalar_lea.vmem [#allocation8], %s270
          %273 = vsyncadd %s269, 0
          %s274 = scalar_lea.hbm %s2, %s28
          %s276 = sshll.u32 %s274, 4
          %s277 = int_to_ptr.hbm [resolvable:$true] %s276
          %s278 = sshll.u32 %s271, 4
          %s279 = int_to_ptr.vmem [resolvable:$true] %s278
          %281 = dma.hbm_to_vmem [thread:$0]  %s277, 16, %s279, %s269
        $region36: #{tpu_custom_call.1} parent=23 // pred_fallthru
          _
      $region24: #{tpu_custom_call.1} parent=5 // pred_fallthru
        _
      %p282 = scmp.le.s32.totalorder 1, %s21
      %p283 = scmp.lt.s32.totalorder %s21, 3
      %p284 = pnand %p282, %p283
      %p285 = pneg %p284
      // Predicated region
      $region37: #{tpu_custom_call.1} parent=5 // pred_check
        _
      $region38: #{tpu_custom_call.1} parent=5 // pred_check_branch
        %287 = sbr.rel (%p284) target = $region40
      $region39: #{tpu_custom_call.1} parent=5 // pred_region
        %s288 = ssub.s32 %s21, 1
        %s289 = sand.u32 %s48, 1
        %s290 = scalar_lea.sflag [#allocation4], %s289
        %s291 = sand.u32 %s48, 1
        %s292 = smul.addr %s291, 8
        %s293 = scalar_lea.vmem [#allocation3], %s292
        // Predicated region
        $region41: #{tpu_custom_call.1} parent=39 // pred_check
          %p294 = pneg %p61
        $region42: #{tpu_custom_call.1} parent=39 // pred_check_branch
          %296 = sbr.rel (%p294) target = $region44
        $region43: #{tpu_custom_call.1} parent=39 // pred_region
          %298 = dma.done %s290, 128
        $region44: #{tpu_custom_call.1} parent=39 // pred_fallthru
          _
        %s299 = sand.u32 %s26, 1
        %s300 = scalar_lea.sflag [#allocation7], %s299
        %s301 = sand.u32 %s74, 1
        %s302 = smul.addr %s301, 64
        %s303 = scalar_lea.vmem [#allocation6], %s302
        // Predicated region
        $region45: #{tpu_custom_call.1} parent=39 // pred_check
          %p304 = pneg %p87
        $region46: #{tpu_custom_call.1} parent=39 // pred_check_branch
          %306 = sbr.rel (%p304) target = $region48
        $region47: #{tpu_custom_call.1} parent=39 // pred_region
          %308 = dma.done %s300, 1024
        $region48: #{tpu_custom_call.1} parent=39 // pred_fallthru
          _
        %s309 = sand.u32 %s26, 1
        %s310 = scalar_lea.sflag [#allocation7], %s309
        %s311 = sand.u32 %s100, 1
        %s312 = scalar_lea.vmem [#allocation8], %s311
        // Predicated region
        $region49: #{tpu_custom_call.1} parent=39 // pred_check
          %p313 = pneg %p113
        $region50: #{tpu_custom_call.1} parent=39 // pred_check_branch
          %315 = sbr.rel (%p313) target = $region52
        $region51: #{tpu_custom_call.1} parent=39 // pred_region
          %317 = dma.done %s310, 16
        $region52: #{tpu_custom_call.1} parent=39 // pred_fallthru
          _
        // Predicated region
        $region53: #{tpu_custom_call.1} parent=39 // pred_check
          %p318 = pneg %p134
        $region54: #{tpu_custom_call.1} parent=39 // pred_check_branch
          %320 = sbr.rel (%p318) target = $region56
        $region55: #{tpu_custom_call.1} parent=39 // pred_region
          %322 = dma.done [#allocation10], 1024
        $region56: #{tpu_custom_call.1} parent=39 // pred_fallthru
          _
        %s323 = sand.u32 %s48, 1
        %s324 = scalar_lea.sflag [#allocation4], %s323
        %s325 = sand.u32 %s48, 1
        %s326 = smul.addr %s325, 8
        %s327 = scalar_lea.vmem [#allocation3], %s326
        %p328 = pneg %p61
        %p329 = pneg %p58
        %s330 = sand.u32 %s26, 1
        %s331 = scalar_lea.sflag [#allocation7], %s330
        %s332 = sand.u32 %s74, 1
        %s333 = smul.addr %s332, 64
        %s334 = scalar_lea.vmem [#allocation6], %s333
        %p335 = pneg %p87
        %p336 = pneg %p84
        %s337 = sand.u32 %s26, 1
        %s338 = scalar_lea.sflag [#allocation7], %s337
        %s339 = sand.u32 %s100, 1
        %s340 = scalar_lea.vmem [#allocation8], %s339
        %p341 = pneg %p113
        %p342 = pneg %p110
        %p343 = pneg %p134
        %p344 = pneg %p131
        %p345 = pneg %p155
        %p346 = pneg %p152
        %p347 = pneg %p183
        %p348 = pneg %p180
        %s349 = sand.u32 %s170, 1
        %s350 = scalar_lea.sflag [#allocation5], %s349
        %s351 = sand.u32 %s170, 1
        %s352 = smul.addr %s351, 16
        %s353 = scalar_lea.vmem [#allocation11], %s352
        %s354 = smul.u32 2, %s31
        %s355 = smul.u32 2, %s31
        %v356 = vld [vmem:[#allocation9] sm:$0xf]
        %v357 = vld [vmem:[#allocation9 + $0x4] sm:$0xf]
        %v358 = vld [vmem:[#allocation9 + $0x8] sm:$0xf]
        %v359 = vld [vmem:[#allocation9 + $0xc] sm:$0xf]
        %v360 = vld [vmem:[#allocation9 + $0x10] sm:$0xf]
        %v361 = vld [vmem:[#allocation9 + $0x14] sm:$0xf]
        %v362 = vld [vmem:[#allocation9 + $0x18] sm:$0xf]
        %v363 = vld [vmem:[#allocation9 + $0x1c] sm:$0xf]
        %v364 = vld [vmem:[#allocation9 + $0x20] sm:$0xf]
        %v365 = vld [vmem:[#allocation9 + $0x24] sm:$0xf]
        %v366 = vld [vmem:[#allocation9 + $0x28] sm:$0xf]
        %v367 = vld [vmem:[#allocation9 + $0x2c] sm:$0xf]
        %v368 = vld [vmem:[#allocation9 + $0x30] sm:$0xf]
        %v369 = vld [vmem:[#allocation9 + $0x34] sm:$0xf]
        %v370 = vld [vmem:[#allocation9 + $0x38] sm:$0xf]
        %v371 = vld [vmem:[#allocation9 + $0x3c] sm:$0xf]
        %v372 = vld [vmem:[%s4] sm:$0x1]
        %p373 = scmp.eq.s32.totalorder %s31, 0
        // Predicated region
        $region57: #{tpu_custom_call.1} parent=39 // pred_check
          %p374 = pneg %p373
        $region58: #{tpu_custom_call.1} parent=39 // pred_check_branch
          %376 = sbr.rel (%p374) target = $region60
        $region59: #{tpu_custom_call.1} parent=39 // pred_region
          %v377 = vld [vmem:[%s303] sm:$0xf]
          %v378 = vld [vmem:[%s303 + $0x4] sm:$0xf]
          %v379 = vld [vmem:[%s303 + $0x8] sm:$0xf]
          %v380 = vld [vmem:[%s303 + $0xc] sm:$0xf]
          %v381 = vld [vmem:[%s303 + $0x10] sm:$0xf]
          %v382 = vld [vmem:[%s303 + $0x14] sm:$0xf]
          %v383 = vld [vmem:[%s303 + $0x18] sm:$0xf]
          %v384 = vld [vmem:[%s303 + $0x1c] sm:$0xf]
          %v385 = vld [vmem:[%s303 + $0x20] sm:$0xf]
          %v386 = vld [vmem:[%s303 + $0x24] sm:$0xf]
          %v387 = vld [vmem:[%s303 + $0x28] sm:$0xf]
          %v388 = vld [vmem:[%s303 + $0x2c] sm:$0xf]
          %v389 = vld [vmem:[%s303 + $0x30] sm:$0xf]
          %v390 = vld [vmem:[%s303 + $0x34] sm:$0xf]
          %v391 = vld [vmem:[%s303 + $0x38] sm:$0xf]
          %v392 = vld [vmem:[%s303 + $0x3c] sm:$0xf]
          %v394 = vperm.slane %v372, 0
          %v412 = vunpack.c.l.b16 %v377
          %v413 = vunpack.c.l.b16 %v378
          %v414 = vunpack.c.l.b16 %v379
          %v415 = vunpack.c.l.b16 %v380
          %v416 = vunpack.c.l.b16 %v381
          %v417 = vunpack.c.l.b16 %v382
          %v418 = vunpack.c.l.b16 %v383
          %v419 = vunpack.c.l.b16 %v384
          %v420 = vunpack.c.l.b16 %v385
          %v421 = vunpack.c.l.b16 %v386
          %v422 = vunpack.c.l.b16 %v387
          %v423 = vunpack.c.l.b16 %v388
          %v424 = vunpack.c.l.b16 %v389
          %v425 = vunpack.c.l.b16 %v390
          %v426 = vunpack.c.l.b16 %v391
          %v427 = vunpack.c.l.b16 %v392
          %v428 = vpack.c.b16 %v413, %v412
          %v429 = vpack.c.b16 %v415, %v414
          %v430 = vpack.c.b16 %v417, %v416
          %v431 = vpack.c.b16 %v419, %v418
          %v432 = vpack.c.b16 %v421, %v420
          %v433 = vpack.c.b16 %v423, %v422
          %v434 = vpack.c.b16 %v425, %v424
          %v435 = vpack.c.b16 %v427, %v426
          %v460 = vunpack.c.l.b16 %v356
          %v461 = vunpack.c.l.b16 %v357
          %v462 = vunpack.c.l.b16 %v358
          %v463 = vunpack.c.l.b16 %v359
          %v464 = vunpack.c.l.b16 %v360
          %v465 = vunpack.c.l.b16 %v361
          %v466 = vunpack.c.l.b16 %v362
          %v467 = vunpack.c.l.b16 %v363
          %v468 = vunpack.c.l.b16 %v364
          %v469 = vunpack.c.l.b16 %v365
          %v470 = vunpack.c.l.b16 %v366
          %v471 = vunpack.c.l.b16 %v367
          %v472 = vunpack.c.l.b16 %v368
          %v473 = vunpack.c.l.b16 %v369
          %v474 = vunpack.c.l.b16 %v370
          %v475 = vunpack.c.l.b16 %v371
          %v476 = vpack.c.b16 %v461, %v460
          %v477 = vpack.c.b16 %v463, %v462
          %v478 = vpack.c.b16 %v465, %v464
          %v479 = vpack.c.b16 %v467, %v466
          %v480 = vpack.c.b16 %v469, %v468
          %v481 = vpack.c.b16 %v471, %v470
          %v482 = vpack.c.b16 %v473, %v472
          %v483 = vpack.c.b16 %v475, %v474
          %492 = vmatpush.bf16.msra.mxu0 %v483
          %493 = vmatpush.bf16.msra.mxu0 %v482
          %494 = vmatpush.bf16.msra.mxu0 %v481
          %495 = vmatpush.bf16.msra.mxu0 %v480
          %496 = vmatpush.bf16.msra.mxu0 %v479
          %497 = vmatpush.bf16.msra.mxu0 %v478
          %498 = vmatpush.bf16.msra.mxu0 %v477
          %499 = vmatpush.bf16.msra.mxu0 %v476
          %500 = vmatmul.bf16.gmra.mxu0 %v428
          %v501 = vpop.f32.mrf.mxu0
          %v502 = vadd.f32 %v394, %v501
          %v503 = vpop.f32.mrf.mxu0
          %v504 = vadd.f32 %v394, %v503
          %505 = vmatmul.bf16.gmra.mxu0 %v429
          %v506 = vpop.f32.mrf.mxu0
          %v507 = vadd.f32 %v394, %v506
          %v508 = vpop.f32.mrf.mxu0
          %v509 = vadd.f32 %v394, %v508
          %510 = vmatmul.bf16.gmra.mxu0 %v430
          %v511 = vpop.f32.mrf.mxu0
          %v512 = vadd.f32 %v394, %v511
          %v513 = vpop.f32.mrf.mxu0
          %v514 = vadd.f32 %v394, %v513
          %515 = vmatmul.bf16.gmra.mxu0 %v431
          %v516 = vpop.f32.mrf.mxu0
          %v517 = vadd.f32 %v394, %v516
          %v518 = vpop.f32.mrf.mxu0
          %v519 = vadd.f32 %v394, %v518
          %520 = vmatmul.bf16.gmra.mxu0 %v432
          %v521 = vpop.f32.mrf.mxu0
          %v522 = vadd.f32 %v394, %v521
          %v523 = vpop.f32.mrf.mxu0
          %v524 = vadd.f32 %v394, %v523
          %525 = vmatmul.bf16.gmra.mxu0 %v433
          %v526 = vpop.f32.mrf.mxu0
          %v527 = vadd.f32 %v394, %v526
          %v528 = vpop.f32.mrf.mxu0
          %v529 = vadd.f32 %v394, %v528
          %530 = vmatmul.bf16.gmra.mxu0 %v434
          %v531 = vpop.f32.mrf.mxu0
          %v532 = vadd.f32 %v394, %v531
          %v533 = vpop.f32.mrf.mxu0
          %v534 = vadd.f32 %v394, %v533
          %535 = vmatmul.bf16.gmra.mxu0 %v435
          %v536 = vpop.f32.mrf.mxu0
          %v537 = vadd.f32 %v394, %v536
          %v538 = vpop.f32.mrf.mxu0
          %v539 = vadd.f32 %v394, %v538
          %540 = vdwg.mxu0
          %v541 = vmax.f32 %v502, 0.0
          %v542 = vmax.f32 %v504, 0.0
          %v543 = vmax.f32 %v507, 0.0
          %v544 = vmax.f32 %v509, 0.0
          %v545 = vmax.f32 %v512, 0.0
          %v546 = vmax.f32 %v514, 0.0
          %v547 = vmax.f32 %v517, 0.0
          %v548 = vmax.f32 %v519, 0.0
          %v549 = vmax.f32 %v522, 0.0
          %v550 = vmax.f32 %v524, 0.0
          %v551 = vmax.f32 %v527, 0.0
          %v552 = vmax.f32 %v529, 0.0
          %v553 = vmax.f32 %v532, 0.0
          %v554 = vmax.f32 %v534, 0.0
          %v555 = vmax.f32 %v537, 0.0
          %v556 = vmax.f32 %v539, 0.0
          %v557 = vpack.c.bf16 %v541, %v541
          %v558 = vpack.c.bf16 %v542, %v542
          %v559 = vpack.c.bf16 %v543, %v543
          %v560 = vpack.c.bf16 %v544, %v544
          %v561 = vpack.c.bf16 %v545, %v545
          %v562 = vpack.c.bf16 %v546, %v546
          %v563 = vpack.c.bf16 %v547, %v547
          %v564 = vpack.c.bf16 %v548, %v548
          %v565 = vpack.c.bf16 %v549, %v549
          %v566 = vpack.c.bf16 %v550, %v550
          %v567 = vpack.c.bf16 %v551, %v551
          %v568 = vpack.c.bf16 %v552, %v552
          %v569 = vpack.c.bf16 %v553, %v553
          %v570 = vpack.c.bf16 %v554, %v554
          %v571 = vpack.c.bf16 %v555, %v555
          %v572 = vpack.c.bf16 %v556, %v556
          %573 = vst [vmem:[#allocation2] sm:$0xf] %v557
          %574 = vst [vmem:[#allocation2 + $0x4] sm:$0xf] %v558
          %575 = vst [vmem:[#allocation2 + $0x8] sm:$0xf] %v559
          %576 = vst [vmem:[#allocation2 + $0xc] sm:$0xf] %v560
          %577 = vst [vmem:[#allocation2 + $0x10] sm:$0xf] %v561
          %578 = vst [vmem:[#allocation2 + $0x14] sm:$0xf] %v562
          %579 = vst [vmem:[#allocation2 + $0x18] sm:$0xf] %v563
          %580 = vst [vmem:[#allocation2 + $0x1c] sm:$0xf] %v564
          %581 = vst [vmem:[#allocation2 + $0x20] sm:$0xf] %v565
          %582 = vst [vmem:[#allocation2 + $0x24] sm:$0xf] %v566
          %583 = vst [vmem:[#allocation2 + $0x28] sm:$0xf] %v567
          %584 = vst [vmem:[#allocation2 + $0x2c] sm:$0xf] %v568
          %585 = vst [vmem:[#allocation2 + $0x30] sm:$0xf] %v569
          %586 = vst [vmem:[#allocation2 + $0x34] sm:$0xf] %v570
          %587 = vst [vmem:[#allocation2 + $0x38] sm:$0xf] %v571
          %588 = vst [vmem:[#allocation2 + $0x3c] sm:$0xf] %v572
        $region60: #{tpu_custom_call.1} parent=39 // pred_fallthru
          _
        %v589 = vld [vmem:[%s293] sm:$0xf]
        %v590 = vld [vmem:[%s293 + $0x4] sm:$0xf]
        %v592 = vperm.slane %v372, 0
        %v596 = vunpack.c.l.b16 %v589
        %v597 = vunpack.c.l.b16 %v590
        %v598 = vpack.c.b16 %v597, %v596
        %v616 = vunpack.c.l.b16 %v356
        %v617 = vunpack.c.l.b16 %v357
        %v618 = vunpack.c.l.b16 %v358
        %v619 = vunpack.c.l.b16 %v359
        %v620 = vunpack.c.l.b16 %v360
        %v621 = vunpack.c.l.b16 %v361
        %v622 = vunpack.c.l.b16 %v362
        %v623 = vunpack.c.l.b16 %v363
        %v624 = vunpack.c.l.b16 %v364
        %v625 = vunpack.c.l.b16 %v365
        %v626 = vunpack.c.l.b16 %v366
        %v627 = vunpack.c.l.b16 %v367
        %v628 = vunpack.c.l.b16 %v368
        %v629 = vunpack.c.l.b16 %v369
        %v630 = vunpack.c.l.b16 %v370
        %v631 = vunpack.c.l.b16 %v371
        %v632 = vpack.c.b16 %v617, %v616
        %v633 = vpack.c.b16 %v619, %v618
        %v634 = vpack.c.b16 %v621, %v620
        %v635 = vpack.c.b16 %v623, %v622
        %v636 = vpack.c.b16 %v625, %v624
        %v637 = vpack.c.b16 %v627, %v626
        %v638 = vpack.c.b16 %v629, %v628
        %v639 = vpack.c.b16 %v631, %v630
        %648 = vmatpush.bf16.msra.mxu0 %v639
        %649 = vmatpush.bf16.msra.mxu0 %v638
        %650 = vmatpush.bf16.msra.mxu0 %v637
        %651 = vmatpush.bf16.msra.mxu0 %v636
        %652 = vmatpush.bf16.msra.mxu0 %v635
        %653 = vmatpush.bf16.msra.mxu0 %v634
        %654 = vmatpush.bf16.msra.mxu0 %v633
        %655 = vmatpush.bf16.msra.mxu0 %v632
        %656 = vmatmul.bf16.gmra.mxu0 %v598
        %v657 = vpop.f32.mrf.mxu0
        %v658 = vadd.f32 %v592, %v657
        %v659 = vpop.f32.mrf.mxu0
        %v660 = vadd.f32 %v592, %v659
        %661 = vdwg.mxu0
        %v662 = vmax.f32 %v658, 0.0
        %v663 = vmax.f32 %v660, 0.0
        %v664 = vpack.c.bf16 %v663, %v662
        %v665 = vld [vmem:[#allocation2] sm:$0xf]
        %v666 = vld [vmem:[#allocation2 + $0x4] sm:$0xf]
        %v667 = vld [vmem:[#allocation2 + $0x8] sm:$0xf]
        %v668 = vld [vmem:[#allocation2 + $0xc] sm:$0xf]
        %v669 = vld [vmem:[#allocation2 + $0x10] sm:$0xf]
        %v670 = vld [vmem:[#allocation2 + $0x14] sm:$0xf]
        %v671 = vld [vmem:[#allocation2 + $0x18] sm:$0xf]
        %v672 = vld [vmem:[#allocation2 + $0x1c] sm:$0xf]
        %v673 = vld [vmem:[#allocation2 + $0x20] sm:$0xf]
        %v674 = vld [vmem:[#allocation2 + $0x24] sm:$0xf]
        %v675 = vld [vmem:[#allocation2 + $0x28] sm:$0xf]
        %v676 = vld [vmem:[#allocation2 + $0x2c] sm:$0xf]
        %v677 = vld [vmem:[#allocation2 + $0x30] sm:$0xf]
        %v678 = vld [vmem:[#allocation2 + $0x34] sm:$0xf]
        %v679 = vld [vmem:[#allocation2 + $0x38] sm:$0xf]
        %v680 = vld [vmem:[#allocation2 + $0x3c] sm:$0xf]
        %v681 = vld [vmem:[%s312] sm:$0x1]
        %v683 = vperm.slane %v681, 0
        %v701 = vunpack.c.l.b16 %v665
        %v702 = vunpack.c.l.b16 %v666
        %v703 = vunpack.c.l.b16 %v667
        %v704 = vunpack.c.l.b16 %v668
        %v705 = vunpack.c.l.b16 %v669
        %v706 = vunpack.c.l.b16 %v670
        %v707 = vunpack.c.l.b16 %v671
        %v708 = vunpack.c.l.b16 %v672
        %v709 = vunpack.c.l.b16 %v673
        %v710 = vunpack.c.l.b16 %v674
        %v711 = vunpack.c.l.b16 %v675
        %v712 = vunpack.c.l.b16 %v676
        %v713 = vunpack.c.l.b16 %v677
        %v714 = vunpack.c.l.b16 %v678
        %v715 = vunpack.c.l.b16 %v679
        %v716 = vunpack.c.l.b16 %v680
        %v717 = vpack.c.b16 %v702, %v701
        %v718 = vpack.c.b16 %v704, %v703
        %v719 = vpack.c.b16 %v706, %v705
        %v720 = vpack.c.b16 %v708, %v707
        %v721 = vpack.c.b16 %v710, %v709
        %v722 = vpack.c.b16 %v712, %v711
        %v723 = vpack.c.b16 %v714, %v713
        %v724 = vpack.c.b16 %v716, %v715
        %733 = vmatpush.bf16.xpose.msra.mxu0 %v724
        %734 = vmatpush.bf16.xpose.msra.mxu0 %v723
        %735 = vmatpush.bf16.xpose.msra.mxu0 %v722
        %736 = vmatpush.bf16.xpose.msra.mxu0 %v721
        %737 = vmatpush.bf16.xpose.msra.mxu0 %v720
        %738 = vmatpush.bf16.xpose.msra.mxu0 %v719
        %739 = vmatpush.bf16.xpose.msra.mxu0 %v718
        %740 = vmatpush.bf16.xpose.msra.mxu0 %v717
        %741 = vmatmul.bf16.gmra.mxu0 %v664
        %v742 = vpop.f32.mrf.mxu0
        %v743 = vadd.f32 %v683, %v742
        %v744 = vpop.f32.mrf.mxu0
        %v745 = vadd.f32 %v683, %v744
        %746 = vdwg.mxu0
        %747 = vmax.xlane.f32.xlu0 %v743
        %v748 = vpop.xlane.xlu0 %747
        %749 = vmax.xlane.f32.xlu0 %v745
        %v750 = vpop.xlane.xlu0 %749
        %v751 = vsub.f32 %v743, %v748
        %v752 = vsub.f32 %v745, %v750
        %v753 = vmul.f32 %v751, 1.442695
        %v754 = vpow.pop %v753
        %v755 = vmul.f32 %v752, 1.442695
        %v756 = vpow.pop %v755
        %757 = vadd.xlane.f32.xlu0 %v754
        %v758 = vpop.xlane.xlu0 %757
        %759 = vadd.xlane.f32.xlu0 %v756
        %v760 = vpop.xlane.xlu0 %759
        %v761 = vrcp.pop %v758
        %v762 = vrcp.pop %v760
        %v763 = vmul.f32 %v754, %v761
        %v764 = vmul.f32 %v756, %v762
        %v765 = vpack.c.bf16 %v764, %v763
        %v766 = vld [vmem:[%s303] sm:$0xf]
        %v767 = vld [vmem:[%s303 + $0x4] sm:$0xf]
        %v768 = vld [vmem:[%s303 + $0x8] sm:$0xf]
        %v769 = vld [vmem:[%s303 + $0xc] sm:$0xf]
        %v770 = vld [vmem:[%s303 + $0x10] sm:$0xf]
        %v771 = vld [vmem:[%s303 + $0x14] sm:$0xf]
        %v772 = vld [vmem:[%s303 + $0x18] sm:$0xf]
        %v773 = vld [vmem:[%s303 + $0x1c] sm:$0xf]
        %v774 = vld [vmem:[%s303 + $0x20] sm:$0xf]
        %v775 = vld [vmem:[%s303 + $0x24] sm:$0xf]
        %v776 = vld [vmem:[%s303 + $0x28] sm:$0xf]
        %v777 = vld [vmem:[%s303 + $0x2c] sm:$0xf]
        %v778 = vld [vmem:[%s303 + $0x30] sm:$0xf]
        %v779 = vld [vmem:[%s303 + $0x34] sm:$0xf]
        %v780 = vld [vmem:[%s303 + $0x38] sm:$0xf]
        %v781 = vld [vmem:[%s303 + $0x3c] sm:$0xf]
        %v798 = vunpack.c.l.b16 %v766
        %v799 = vunpack.c.l.b16 %v767
        %v800 = vunpack.c.l.b16 %v768
        %v801 = vunpack.c.l.b16 %v769
        %v802 = vunpack.c.l.b16 %v770
        %v803 = vunpack.c.l.b16 %v771
        %v804 = vunpack.c.l.b16 %v772
        %v805 = vunpack.c.l.b16 %v773
        %v806 = vunpack.c.l.b16 %v774
        %v807 = vunpack.c.l.b16 %v775
        %v808 = vunpack.c.l.b16 %v776
        %v809 = vunpack.c.l.b16 %v777
        %v810 = vunpack.c.l.b16 %v778
        %v811 = vunpack.c.l.b16 %v779
        %v812 = vunpack.c.l.b16 %v780
        %v813 = vunpack.c.l.b16 %v781
        %v814 = vpack.c.b16 %v799, %v798
        %v815 = vpack.c.b16 %v801, %v800
        %v816 = vpack.c.b16 %v803, %v802
        %v817 = vpack.c.b16 %v805, %v804
        %v818 = vpack.c.b16 %v807, %v806
        %v819 = vpack.c.b16 %v809, %v808
        %v820 = vpack.c.b16 %v811, %v810
        %v821 = vpack.c.b16 %v813, %v812
        %830 = vmatpush.bf16.msra.mxu0 %v821
        %831 = vmatpush.bf16.msra.mxu0 %v820
        %832 = vmatpush.bf16.msra.mxu0 %v819
        %833 = vmatpush.bf16.msra.mxu0 %v818
        %834 = vmatpush.bf16.msra.mxu0 %v817
        %835 = vmatpush.bf16.msra.mxu0 %v816
        %836 = vmatpush.bf16.msra.mxu0 %v815
        %837 = vmatpush.bf16.msra.mxu0 %v814
        %838 = vmatmul.bf16.gmra.mxu0 %v765
        %v839 = vpop.f32.mrf.mxu0
        %v840 = vadd.f32 0.0, %v839
        %v841 = vpop.f32.mrf.mxu0
        %v842 = vadd.f32 0.0, %v841
        %843 = vdwg.mxu0
        %844 = vst [vmem:[%s353] sm:$0xff] %v840
        %845 = vst [vmem:[%s353 + $0x8] sm:$0xff] %v842
        %s846 = sand.u32 %s170, 1
        %s847 = scalar_lea.sflag [#allocation5], %s846
        %s848 = sand.u32 %s170, 1
        %s849 = smul.addr %s848, 16
        %s850 = scalar_lea.vmem [#allocation11], %s849
        // Predicated region
        $region61: #{tpu_custom_call.1} parent=39 // pred_check
          %p851 = pneg %p180
        $region62: #{tpu_custom_call.1} parent=39 // pred_check_branch
          %853 = sbr.rel (%p851) target = $region64
        $region63: #{tpu_custom_call.1} parent=39 // pred_region
          %s854 = smul.u32 2, %s31
          %856 = vsyncadd %s847, 0
          %s857 = smul.addr %s30, 2
          %s858 = sadd.s32 %s854, %s857
          %s859 = smul.addr %s858, 8
          %s860 = scalar_lea.hbm %s5, %s859
          %s861 = sshll.u32 %s850, 4
          %s862 = int_to_ptr.vmem [resolvable:$true] %s861
          %s863 = sshll.u32 %s860, 4
          %s864 = int_to_ptr.hbm [resolvable:$true] %s863
          %869 = dma.vmem_to_hbm [thread:$0]  %s862, 256, %s864, %s847, 128, 128, 8
        $region64: #{tpu_custom_call.1} parent=39 // pred_fallthru
          _
      $region40: #{tpu_custom_call.1} parent=5 // pred_fallthru
        _
      %p870 = scmp.le.s32.totalorder 2, %s21
      // Predicated region
      $region65: #{tpu_custom_call.1} parent=5 // pred_check
        %p871 = pneg %p870
      $region66: #{tpu_custom_call.1} parent=5 // pred_check_branch
        %873 = sbr.rel (%p871) target = $region68
      $region67: #{tpu_custom_call.1} parent=5 // pred_region
        %s874 = ssub.s32 %s21, 2
        // Predicated region
        $region69: #{tpu_custom_call.1} parent=67 // pred_check
          %p875 = pneg %p186
        $region70: #{tpu_custom_call.1} parent=67 // pred_check_branch
          %877 = sbr.rel (%p875) target = $region72
        $region71: #{tpu_custom_call.1} parent=67 // pred_region
          %s878 = sand.u32 %s171, 1
          %s879 = scalar_lea.sflag [#allocation5], %s878
          %s880 = sand.u32 %s171, 1
          %s881 = smul.addr %s880, 16
          %s882 = scalar_lea.vmem [#allocation11], %s881
          %884 = dma.done %s879, 256
        $region72: #{tpu_custom_call.1} parent=67 // pred_fallthru
          _
      $region68: #{tpu_custom_call.1} parent=5 // pred_fallthru
        _
    $region6: #{tpu_custom_call.1} parent=1 // loop_footer
      %s25 = sadd.s32 1, %s21
    $region7: #{tpu_custom_call.1} parent=1 // loop_footer_branch
      %20 = sbr.rel target = $region3
    $region8: #{tpu_custom_call.1} parent=1 // loop_exit
      _
    %885 = vsyncpa [#allocation4], 1
    %s886 = scalar_lea.sflag [#allocation4], 1
    %887 = vsyncpa %s886, 1
    %888 = vsyncpa [#allocation7], 1
    %s889 = scalar_lea.sflag [#allocation7], 1
    %890 = vsyncpa %s889, 1
    %891 = vsyncpa [#allocation10], 1
    %892 = vsyncpa [#allocation5], 1
    %s893 = scalar_lea.sflag [#allocation5], 1
    %894 = vsyncpa %s893, 1

</llo_original>
